<compile_context>
chip_gen: v5e
topology: v5e:2x2
jax: 0.10.0
libtpu: 0.0.40
codegen_flags: <defaults>
</compile_context>

<pallas_src>
import functools

import jax
import jax.numpy as jnp
from jax.experimental import pallas as pl
from jax.experimental.pallas import tpu as pltpu

LANE = 128


def _round_up(x, m):
    return ((x + m - 1) // m) * m


# ----------------------------------------------------------------------------
# Fused Pallas kernel: stem conv (im2col matmul) + BN/ReLU + 1x1 conv/ReLU
#                      + global average pool + linear head.
# ----------------------------------------------------------------------------
def _fused_clf_kernel(p_ref, w_stem_ref, scale_ref, shift_ref,
                      w_body_ref, b_body_ref, w_fc_ref, b_fc_ref,
                      out_ref, pool_acc, *, inv_hw):
    t = pl.program_id(1)

    @pl.when(t == 0)
    def _init():
        pool_acc[...] = jnp.zeros_like(pool_acc)

    # ---- clf_stem: conv3x3 as matmul (bf16 in, f32 acc) + folded BN/bias/ReLU
    patches = p_ref[0]                                       # (TILE_M, 9*Cin) bf16
    stem = jnp.dot(patches, w_stem_ref[...],
                   preferred_element_type=jnp.float32)       # (TILE_M, C_STEM_P)
    stem = jnp.maximum(stem * scale_ref[...] + shift_ref[...], 0.0)

    # ---- backbone body: conv1x1 as matmul + bias + ReLU (stays in VMEM) -----
    body = jnp.dot(stem.astype(jnp.bfloat16), w_body_ref[...],
                   preferred_element_type=jnp.float32)       # (TILE_M, C_BODY_P)
    body = jnp.maximum(body + b_body_ref[...], 0.0)

    # ---- clf_head (1/2): global average pool -> accumulate column sums ------
    pool_acc[...] += jnp.sum(body, axis=0, keepdims=True)    # (1, C_BODY_P)

    # ---- clf_head (2/2): linear head on the last tile of this image ---------
    @pl.when(t == pl.num_programs(1) - 1)
    def _finalize():
        pooled = pool_acc[...] * inv_hw                      # (1, C_BODY_P) f32
        logits = jnp.dot(pooled, w_fc_ref[...],
                         preferred_element_type=jnp.float32) + b_fc_ref[...]
        out_ref[0] = logits.astype(out_ref.dtype)            # (1, N_PAD)


# ----------------------------------------------------------------------------
# Wrapper-side glue
# ----------------------------------------------------------------------------
def _pick_tile_m(hw, max_tile=1024):
    """Largest multiple-of-8 divisor of hw that is <= max_tile (or hw itself)."""
    if hw <= max_tile:
        return hw
    start = max_tile - (max_tile % 8)
    for cand in range(start, 7, -8):
        if hw % cand == 0:
            return cand
    return hw  # fallback: one full-dim tile per image


def _im2col_3x3_bf16(x_nhwc):
    """3x3 / stride 1 / pad 1 patches, (kh, kw, cin) order -> (B, H*W, 9*Cin) bf16."""
    B, H, W, C = x_nhwc.shape
    xp = jnp.pad(x_nhwc, ((0, 0), (1, 1), (1, 1), (0, 0)))
    patches = jnp.concatenate(
        [xp[:, i:i + H, j:j + W, :] for i in range(3) for j in range(3)], axis=-1)
    return patches.reshape(B, H * W, 9 * C).astype(jnp.bfloat16)


@functools.partial(jax.jit, static_argnames=("tile_m",))
def lossbalnet_clf_forward(images_nchw, params, tile_m=None):
    """clf eval path of LossbalNet._forward_val: (B, Cin, H, W) f32 -> (B, n_cls)."""
    B, Cin, H, W = images_nchw.shape
    HW = H * W
    c_stem = params["w_stem"].shape[0]
    c_body = params["w_body"].shape[0]
    num_classes = params["w_fc"].shape[0]
    c_stem_p = _round_up(c_stem, LANE)
    c_body_p = _round_up(c_body, LANE)
    n_pad = _round_up(num_classes, LANE)

    if tile_m is None:
        tile_m = _pick_tile_m(HW)
    assert HW % tile_m == 0, "tile_m must divide H*W"
    num_tiles = HW // tile_m

    # NCHW -> NHWC, then im2col patches in bf16 (halves patch HBM traffic).
    x = jnp.transpose(images_nchw, (0, 2, 3, 1))
    patches = _im2col_3x3_bf16(x)                              # (B, HW, 9*Cin)

    # Fold conv bias + BatchNorm(eval) into a per-channel affine (f32).
    inv_std = 1.0 / jnp.sqrt(params["bn_var"] + params["bn_eps"])
    g = params["bn_gamma"] * inv_std
    scale = jnp.zeros((1, c_stem_p), jnp.float32).at[0, :c_stem].set(g)
    shift_v = params["bn_beta"] - params["bn_mean"] * g + params["b_stem"] * g
    shift = jnp.zeros((1, c_stem_p), jnp.float32).at[0, :c_stem].set(shift_v)

    # Weights transposed for matmul, zero-padded to 128 lanes, bf16 for MXU.
    w_stem = jnp.transpose(params["w_stem"], (2, 3, 1, 0)).reshape(9 * Cin, c_stem)
    w_stem_p = jnp.zeros((9 * Cin, c_stem_p), jnp.bfloat16).at[:, :c_stem].set(
        w_stem.astype(jnp.bfloat16))

    w_body = params["w_body"].reshape(c_body, c_stem).T        # (c_stem, c_body)
    w_body_p = jnp.zeros((c_stem_p, c_body_p), jnp.bfloat16).at[
        :c_stem, :c_body].set(w_body.astype(jnp.bfloat16))
    b_body_p = jnp.zeros((1, c_body_p), jnp.float32).at[0, :c_body].set(
        params["b_body"])

    w_fc = params["w_fc"].T                                    # (c_body, n_cls)
    w_fc_p = jnp.zeros((c_body_p, n_pad), jnp.float32).at[
        :c_body, :num_classes].set(w_fc)
    b_fc_p = jnp.zeros((1, n_pad), jnp.float32).at[0, :num_classes].set(
        params["b_fc"])

    kernel = functools.partial(_fused_clf_kernel, inv_hw=1.0 / HW)

    flops = (2 * B * HW * (9 * Cin * c_stem_p + c_stem_p * c_body_p)
             + 2 * B * c_body_p * n_pad)
    bytes_accessed = (patches.size * 2 + w_stem_p.size * 2 + w_body_p.size * 2
                      + w_fc_p.size * 4
                      + (scale.size + shift.size + b_body_p.size + b_fc_p.size) * 4
                      + B * n_pad * 4)

    out = pl.pallas_call(
        kernel,
        out_shape=jax.ShapeDtypeStruct((B, 1, n_pad), jnp.float32),
        grid_spec=pltpu.PrefetchScalarGridSpec(
            num_scalar_prefetch=0,
            grid=(B, num_tiles),
            in_specs=[
                pl.BlockSpec((1, tile_m, 9 * Cin), lambda b, t: (b, t, 0)),
                pl.BlockSpec((9 * Cin, c_stem_p), lambda b, t: (0, 0)),
                pl.BlockSpec((1, c_stem_p), lambda b, t: (0, 0)),
                pl.BlockSpec((1, c_stem_p), lambda b, t: (0, 0)),
                pl.BlockSpec((c_stem_p, c_body_p), lambda b, t: (0, 0)),
                pl.BlockSpec((1, c_body_p), lambda b, t: (0, 0)),
                pl.BlockSpec((c_body_p, n_pad), lambda b, t: (0, 0)),
                pl.BlockSpec((1, n_pad), lambda b, t: (0, 0)),
            ],
            out_specs=pl.BlockSpec((1, 1, n_pad), lambda b, t: (b, 0, 0)),
            scratch_shapes=[pltpu.VMEM((1, c_body_p), jnp.float32)],
        ),
        compiler_params=pltpu.CompilerParams(
            dimension_semantics=("parallel", "arbitrary")),
        cost_estimate=pl.CostEstimate(
            flops=flops, transcendentals=0, bytes_accessed=bytes_accessed),
    )(patches, w_stem_p, scale, shift, w_body_p, b_body_p, w_fc_p, b_fc_p)

    return out.reshape(B, n_pad)[:, :num_classes]


# ----------------------------------------------------------------------------
# Parameter construction (mirrors init_weights: kaiming_normal for Conv2d,
# BN gamma=1 / beta=0, kaiming_uniform for Linear, zero biases)
# ----------------------------------------------------------------------------
def make_params(key, c_in=3, c_stem=16, c_body=32, num_classes=10):
    k0, k1, k2 = jax.random.split(key, 3)

    fan_in_stem = c_in * 3 * 3
    std_stem = (2.0 / fan_in_stem) ** 0.5
    w_stem = jax.random.normal(k0, (c_stem, c_in, 3, 3), jnp.float32) * std_stem
    b_stem = jnp.zeros((c_stem,), jnp.float32)

    bn_gamma = jnp.ones((c_stem,), jnp.float32)
    bn_beta = jnp.zeros((c_stem,), jnp.float32)
    bn_mean = jnp.zeros((c_stem,), jnp.float32)
    bn_var = jnp.ones((c_stem,), jnp.float32)
    bn_eps = 1e-5

    fan_in_body = c_stem
    std_body = (2.0 / fan_in_body) ** 0.5
    w_body = jax.random.normal(k1, (c_body, c_stem, 1, 1), jnp.float32) * std_body
    b_body = jnp.zeros((c_body,), jnp.float32)

    fan_in_fc = c_body
    bound = (2.0 ** 0.5) * (3.0 / fan_in_fc) ** 0.5
    w_fc = jax.random.uniform(
        k2, (num_classes, c_body), jnp.float32, minval=-bound, maxval=bound)
    b_fc = jnp.zeros((num_classes,), jnp.float32)

    return dict(
        w_stem=w_stem, b_stem=b_stem,
        bn_gamma=bn_gamma, bn_beta=bn_beta, bn_mean=bn_mean, bn_var=bn_var,
        bn_eps=bn_eps,
        w_body=w_body, b_body=b_body,
        w_fc=w_fc, b_fc=b_fc,
    )


# ----------------------------------------------------------------------------
# Pure-JAX f32 reference for validation (same math, no Pallas)
# ----------------------------------------------------------------------------
def reference_forward(images_nchw, params):
    x = jnp.transpose(images_nchw, (0, 2, 3, 1))
    w = jnp.transpose(params["w_stem"], (2, 3, 1, 0))          # HWIO
    y = jax.lax.conv_general_dilated(
        x, w, window_strides=(1, 1), padding="SAME",
        dimension_numbers=("NHWC", "HWIO", "NHWC")) + params["b_stem"]
    inv_std = 1.0 / jnp.sqrt(params["bn_var"] + params["bn_eps"])
    y = (y - params["bn_mean"]) * (params["bn_gamma"] * inv_std) + params["bn_beta"]
    y = jnp.maximum(y, 0.0)
    wb = params["w_body"].reshape(params["w_body"].shape[0], -1)  # (c_body, c_stem)
    z = jnp.maximum(jnp.einsum("bhwc,oc->bhwo", y, wb) + params["b_body"], 0.0)
    pooled = z.mean(axis=(1, 2))
    return pooled @ params["w_fc"].T + params["b_fc"]


if __name__ == "__main__":
    key = jax.random.PRNGKey(0)
    k_img, k_par = jax.random.split(key)

    B, Cin, H, W = 2, 3, 16, 16
    images = jax.random.normal(k_img, (B, Cin, H, W), jnp.float32)  # NCHW (PyTorch)
    params = make_params(k_par, c_in=Cin, c_stem=16, c_body=32, num_classes=10)

    # tile_m=128 -> 2 M-tiles per image, exercising the pipelined pool-reduce path.
    logits = lossbalnet_clf_forward(images, params, tile_m=128)
    jax.block_until_ready(logits)
    assert logits.shape == (B, 10)

    ref = reference_forward(images, params)
    max_err = float(jnp.max(jnp.abs(logits - ref)))
    assert jnp.allclose(logits, ref, rtol=5e-2, atol=5e-2), max_err
    print("KERNEL_OK")
</pallas_src>

<mosaic_0001>
module attributes {stable_mosaic.version = 11 : i64} {
  func.func @_fused_clf_kernel(%arg0: i32, %arg1: i32, %arg2: memref<1x128x27xbf16, #tpu.memory_space<vmem>>, %arg3: memref<27x128xbf16, #tpu.memory_space<vmem>>, %arg4: memref<1x128xf32, #tpu.memory_space<vmem>>, %arg5: memref<1x128xf32, #tpu.memory_space<vmem>>, %arg6: memref<128x128xbf16, #tpu.memory_space<vmem>>, %arg7: memref<1x128xf32, #tpu.memory_space<vmem>>, %arg8: memref<128x128xf32, #tpu.memory_space<vmem>>, %arg9: memref<1x128xf32, #tpu.memory_space<vmem>>, %arg10: memref<1x1x128xf32, #tpu.memory_space<vmem>>, %arg11: memref<1x128xf32, #tpu.memory_space<vmem>>) attributes {dimension_semantics = [#tpu.dimension_semantics<parallel>, #tpu.dimension_semantics<arbitrary>], iteration_bounds = array<i64: 2, 2>, scalar_prefetch = 0 : i64, scratch_operands = 1 : i64, tpu.core_type = #tpu.core_type<tc>, window_params = [{transform_indices = @transform_0, window_bounds = array<i64: 1, 128, 27>}, {pipeline_mode = #tpu.pipeline_mode<synchronous>, transform_indices = @transform_1, window_bounds = array<i64: 27, 128>}, {pipeline_mode = #tpu.pipeline_mode<synchronous>, transform_indices = @transform_2, window_bounds = array<i64: 1, 128>}, {pipeline_mode = #tpu.pipeline_mode<synchronous>, transform_indices = @transform_3, window_bounds = array<i64: 1, 128>}, {pipeline_mode = #tpu.pipeline_mode<synchronous>, transform_indices = @transform_4, window_bounds = array<i64: 128, 128>}, {pipeline_mode = #tpu.pipeline_mode<synchronous>, transform_indices = @transform_5, window_bounds = array<i64: 1, 128>}, {pipeline_mode = #tpu.pipeline_mode<synchronous>, transform_indices = @transform_6, window_bounds = array<i64: 128, 128>}, {pipeline_mode = #tpu.pipeline_mode<synchronous>, transform_indices = @transform_7, window_bounds = array<i64: 1, 128>}, {transform_indices = @transform_8, window_bounds = array<i64: 1, 1, 128>}]} {
    %c0_i32 = arith.constant 0 : i32
    %0 = arith.cmpi eq, %arg1, %c0_i32 : i32
    %1 = arith.extui %0 : i1 to i32
    %c0_i32_0 = arith.constant 0 : i32
    %2 = arith.cmpi ne, %1, %c0_i32_0 : i32
    scf.if %2 {
      %cst_22 = arith.constant 0.000000e+00 : f32
      %31 = vector.broadcast %cst_22 : f32 to vector<1x128xf32>
      %c0_23 = arith.constant 0 : index
      %c0_24 = arith.constant 0 : index
      %32 = vector.load %arg11[%c0_23, %c0_24] : memref<1x128xf32, #tpu.memory_space<vmem>>, vector<1x128xf32>
      tpu.vector_store %arg11[%c0_23, %c0_24], %31 {strides = array<i32>} : memref<1x128xf32, #tpu.memory_space<vmem>>, vector<1x128xf32>,
    } else {
    }
    %c0 = arith.constant 0 : index
    %c0_1 = arith.constant 0 : index
    %c0_2 = arith.constant 0 : index
    %3 = vector.load %arg2[%c0, %c0_1, %c0_2] : memref<1x128x27xbf16, #tpu.memory_space<vmem>>, vector<1x128x27xbf16>
    %4 = vector.shape_cast %3 : vector<1x128x27xbf16> to vector<128x27xbf16>
    %c0_3 = arith.constant 0 : index
    %c0_4 = arith.constant 0 : index
    %5 = vector.load %arg3[%c0_3, %c0_4] : memref<27x128xbf16, #tpu.memory_space<vmem>>, vector<27x128xbf16>
    %cst = arith.constant dense<0.000000e+00> : vector<128x128xf32>
    %6 = tpu.matmul %4, %5, %cst {dimension_numbers = #tpu.dot_dimension_numbers<[1], [0], [0], [1], [0, 0, 1, 1], [], []>} : vector<128x27xbf16>, vector<27x128xbf16>, vector<128x128xf32> -> vector<128x128xf32>
    %c0_5 = arith.constant 0 : index
    %c0_6 = arith.constant 0 : index
    %7 = vector.load %arg4[%c0_5, %c0_6] : memref<1x128xf32, #tpu.memory_space<vmem>>, vector<1x128xf32>
    %8 = vector.broadcast %7 : vector<1x128xf32> to vector<128x128xf32>
    %9 = arith.mulf %6, %8 : vector<128x128xf32>
    %c0_7 = arith.constant 0 : index
    %c0_8 = arith.constant 0 : index
    %10 = vector.load %arg5[%c0_7, %c0_8] : memref<1x128xf32, #tpu.memory_space<vmem>>, vector<1x128xf32>
    %11 = vector.broadcast %10 : vector<1x128xf32> to vector<128x128xf32>
    %12 = arith.addf %9, %11 : vector<128x128xf32>
    %cst_9 = arith.constant 0.000000e+00 : f32
    %13 = vector.broadcast %cst_9 : f32 to vector<128x128xf32>
    %14 = arith.maximumf %12, %13 : vector<128x128xf32>
    %15 = arith.truncf %14 : vector<128x128xf32> to vector<128x128xbf16>
    %c0_10 = arith.constant 0 : index
    %c0_11 = arith.constant 0 : index
    %16 = vector.load %arg6[%c0_10, %c0_11] : memref<128x128xbf16, #tpu.memory_space<vmem>>, vector<128x128xbf16>
    %cst_12 = arith.constant dense<0.000000e+00> : vector<128x128xf32>
    %17 = tpu.matmul %15, %16, %cst_12 {dimension_numbers = #tpu.dot_dimension_numbers<[1], [0], [0], [1], [0, 0, 1, 1], [], []>} : vector<128x128xbf16>, vector<128x128xbf16>, vector<128x128xf32> -> vector<128x128xf32>
    %c0_13 = arith.constant 0 : index
    %c0_14 = arith.constant 0 : index
    %18 = vector.load %arg7[%c0_13, %c0_14] : memref<1x128xf32, #tpu.memory_space<vmem>>, vector<1x128xf32>
    %19 = vector.broadcast %18 : vector<1x128xf32> to vector<128x128xf32>
    %20 = arith.addf %17, %19 : vector<128x128xf32>
    %cst_15 = arith.constant 0.000000e+00 : f32
    %21 = vector.broadcast %cst_15 : f32 to vector<128x128xf32>
    %22 = arith.maximumf %20, %21 : vector<128x128xf32>
    %c0_16 = arith.constant 0 : index
    %c0_17 = arith.constant 0 : index
    %23 = vector.load %arg11[%c0_16, %c0_17] : memref<1x128xf32, #tpu.memory_space<vmem>>, vector<1x128xf32>
    %cst_18 = arith.constant dense<0.000000e+00> : vector<128xf32>
    %24 = vector.multi_reduction <add>, %22, %cst_18 [0] : vector<128x128xf32> to vector<128xf32>
    %25 = vector.shape_cast %24 : vector<128xf32> to vector<1x128xf32>
    %26 = arith.addf %23, %25 : vector<1x128xf32>
    %c0_19 = arith.constant 0 : index
    %c0_20 = arith.constant 0 : index
    %27 = vector.load %arg11[%c0_19, %c0_20] : memref<1x128xf32, #tpu.memory_space<vmem>>, vector<1x128xf32>
    tpu.vector_store %arg11[%c0_19, %c0_20], %26 {strides = array<i32>} : memref<1x128xf32, #tpu.memory_space<vmem>>, vector<1x128xf32>,
    %c1_i32 = arith.constant 1 : i32
    %28 = arith.cmpi eq, %arg1, %c1_i32 : i32
    %29 = arith.extui %28 : i1 to i32
    %c0_i32_21 = arith.constant 0 : i32
    %30 = arith.cmpi ne, %29, %c0_i32_21 : i32
    scf.if %30 {
      %c0_22 = arith.constant 0 : index
      %c0_23 = arith.constant 0 : index
      %31 = vector.load %arg11[%c0_22, %c0_23] : memref<1x128xf32, #tpu.memory_space<vmem>>, vector<1x128xf32>
      %cst_24 = arith.constant 3.906250e-03 : f32
      %32 = vector.broadcast %cst_24 : f32 to vector<1x128xf32>
      %33 = arith.mulf %31, %32 : vector<1x128xf32>
      %c0_25 = arith.constant 0 : index
      %c0_26 = arith.constant 0 : index
      %34 = vector.load %arg8[%c0_25, %c0_26] : memref<128x128xf32, #tpu.memory_space<vmem>>, vector<128x128xf32>
      %cst_27 = arith.constant dense<0.000000e+00> : vector<1x128xf32>
      %35 = tpu.matmul %33, %34, %cst_27 {dimension_numbers = #tpu.dot_dimension_numbers<[1], [0], [0], [1], [0, 0, 1, 1], [], []>} : vector<1x128xf32>, vector<128x128xf32>, vector<1x128xf32> -> vector<1x128xf32>
      %c0_28 = arith.constant 0 : index
      %c0_29 = arith.constant 0 : index
      %36 = vector.load %arg9[%c0_28, %c0_29] : memref<1x128xf32, #tpu.memory_space<vmem>>, vector<1x128xf32>
      %37 = arith.addf %35, %36 : vector<1x128xf32>
      %c0_30 = arith.constant 0 : index
      %c0_31 = arith.constant 0 : index
      %c0_32 = arith.constant 0 : index
      %38 = vector.load %arg10[%c0_30, %c0_31, %c0_32] : memref<1x1x128xf32, #tpu.memory_space<vmem>>, vector<1x1x128xf32>
      %39 = vector.shape_cast %38 : vector<1x1x128xf32> to vector<1x128xf32>
      %40 = vector.shape_cast %37 : vector<1x128xf32> to vector<1x1x128xf32>
      tpu.vector_store %arg10[%c0_30, %c0_31, %c0_32], %40 {strides = array<i32>} : memref<1x1x128xf32, #tpu.memory_space<vmem>>, vector<1x1x128xf32>,
    } else {
    }
    return
  }
  func.func @transform_0(%arg0: i32, %arg1: i32) -> (i32, i32, i32) {
    %c0_i32 = arith.constant 0 : i32
    %c0_i32_0 = arith.constant 0 : i32
    return %arg0, %arg1, %c0_i32 : i32, i32, i32
  }
  func.func @transform_1(%arg0: i32, %arg1: i32) -> (i32, i32) {
    %c0_i32 = arith.constant 0 : i32
    %c0_i32_0 = arith.constant 0 : i32
    %c0_i32_1 = arith.constant 0 : i32
    return %c0_i32, %c0_i32_0 : i32, i32
  }
  func.func @transform_2(%arg0: i32, %arg1: i32) -> (i32, i32) {
    %c0_i32 = arith.constant 0 : i32
    %c0_i32_0 = arith.constant 0 : i32
    %c0_i32_1 = arith.constant 0 : i32
    return %c0_i32, %c0_i32_0 : i32, i32
  }
  func.func @transform_3(%arg0: i32, %arg1: i32) -> (i32, i32) {
    %c0_i32 = arith.constant 0 : i32
    %c0_i32_0 = arith.constant 0 : i32
    %c0_i32_1 = arith.constant 0 : i32
    return %c0_i32, %c0_i32_0 : i32, i32
  }
  func.func @transform_4(%arg0: i32, %arg1: i32) -> (i32, i32) {
    %c0_i32 = arith.constant 0 : i32
    %c0_i32_0 = arith.constant 0 : i32
    %c0_i32_1 = arith.constant 0 : i32
    return %c0_i32, %c0_i32_0 : i32, i32
  }
  func.func @transform_5(%arg0: i32, %arg1: i32) -> (i32, i32) {
    %c0_i32 = arith.constant 0 : i32
    %c0_i32_0 = arith.constant 0 : i32
    %c0_i32_1 = arith.constant 0 : i32
    return %c0_i32, %c0_i32_0 : i32, i32
  }
  func.func @transform_6(%arg0: i32, %arg1: i32) -> (i32, i32) {
    %c0_i32 = arith.constant 0 : i32
    %c0_i32_0 = arith.constant 0 : i32
    %c0_i32_1 = arith.constant 0 : i32
    return %c0_i32, %c0_i32_0 : i32, i32
  }
  func.func @transform_7(%arg0: i32, %arg1: i32) -> (i32, i32) {
    %c0_i32 = arith.constant 0 : i32
    %c0_i32_0 = arith.constant 0 : i32
    %c0_i32_1 = arith.constant 0 : i32
    return %c0_i32, %c0_i32_0 : i32, i32
  }
  func.func @transform_8(%arg0: i32, %arg1: i32) -> (i32, i32, i32) {
    %c0_i32 = arith.constant 0 : i32
    %c0_i32_0 = arith.constant 0 : i32
    %c0_i32_1 = arith.constant 0 : i32
    return %arg0, %c0_i32, %c0_i32_0 : i32, i32, i32
  }
}

</mosaic_0001>

<llo_original>
// kernel: lossbalnet_clf_forward.1
$region0: #{lossbalnet_clf_forward.1}
  #allocation0 [shape = 'u32[]', space=smem, size = 0x4, offset = 0x4, fixed_abs, tag = 'smem constant byte address 0x4 - core index']
  #allocation1 [shape = 'u32[72,128]{1,0:T(1,128)}', space=vmem, size = 0x9000, scoped, tag = 'internal scratch']
  #allocation2 [shape = 'f32[1,128]{1,0:T(1,128)}', space=vmem, size = 0x200, scoped, tag = 'scratch operand']
  %s0 = inlined_call_operand.vmem [shape: bf16[2,256,27], index: 0, kind: input, shape index: {}]
  %s1 = inlined_call_operand.vmem [shape: bf16[27,128], index: 1, kind: input, shape index: {}]
  %s2 = inlined_call_operand.vmem [shape: f32[1,128], index: 2, kind: input, shape index: {}]
  %s3 = inlined_call_operand.vmem [shape: f32[1,128], index: 3, kind: input, shape index: {}]
  %s4 = inlined_call_operand.vmem [shape: bf16[128,128], index: 4, kind: input, shape index: {}]
  %s5 = inlined_call_operand.vmem [shape: f32[1,128], index: 5, kind: input, shape index: {}]
  %s6 = inlined_call_operand.vmem [shape: f32[128,128], index: 6, kind: input, shape index: {}]
  %s7 = inlined_call_operand.vmem [shape: f32[1,128], index: 7, kind: input, shape index: {}]
  %s8 = inlined_call_operand.hbm [shape: f32[2,1,128], index: 8, kind: output, shape index: {}]
  %s9 = sld [smem:[#allocation0]]
  $region73: #{lossbalnet_clf_forward.1} parent=0
    _
  %s11 = ssub.s32 1, %s9
  %s12 = scalar_select 0, %s11, %s9
  $region1: #{lossbalnet_clf_forward.1} parent=0
    #allocation3 [shape = 'u8[1024]{0}', space=vmem, size = 0x400, scoped, tag = 'output window, operand 0']
    #allocation4 [shape = 's32[2]{0}', space=sflag, size = 0x8, scoped, tag = 'scoped memory for lossbalnet_clf_forward.1']
    %13 = vsyncpa [#allocation4], 0
    %s14 = scalar_lea.sflag [#allocation4], 1
    %15 = vsyncpa %s14, 0
    loop: start=0, step=1, limit=6
    $region2: #{lossbalnet_clf_forward.1} parent=1 // loop_pre_header
      _
    $region3: #{lossbalnet_clf_forward.1} parent=1 // loop_header
      %s17 = sphi 0, %s21
      %p18 = scmp.ge.s32.totalorder %s17, 6
      %s24 = sphi 0, %s36
      %s25 = sphi 0, %s32
      %s26 = sphi 0, %s24
      %s27 = sphi 0, %s25
      %s28 = sphi 0, %s26
      %s29 = sphi 0, %s27
      %s41 = sphi 0, %s43
      %s44 = sphi 0, %s41
      %s45 = sphi 0, %s44
      %s61 = sphi 0, %s45
      %s65 = sphi 0, %s65
      %s67 = sphi 0, %s65
      %s68 = sphi 0, %s67
      %s82 = sphi 0, %s68
      %s86 = sphi 0, %s86
      %s88 = sphi 0, %s86
      %s89 = sphi 0, %s88
      %s103 = sphi 0, %s89
      %s107 = sphi 0, %s107
      %s109 = sphi 0, %s107
      %s110 = sphi 0, %s109
      %s124 = sphi 0, %s110
      %s128 = sphi 0, %s128
      %s130 = sphi 0, %s128
      %s131 = sphi 0, %s130
      %s145 = sphi 0, %s131
      %s149 = sphi 0, %s149
      %s151 = sphi 0, %s149
      %s152 = sphi 0, %s151
      %s166 = sphi 0, %s152
      %s170 = sphi 0, %s170
      %s172 = sphi 0, %s170
      %s173 = sphi 0, %s172
      %s187 = sphi 0, %s173
      %s191 = sphi 0, %s191
      %s193 = sphi 0, %s191
      %s194 = sphi 0, %s193
      %s208 = sphi 0, %s194
      %s214 = sphi 0, %s216
      %s217 = sphi 0, %s214
      %s218 = sphi 0, %s217
      %s234 = sphi 0, %s218
    $region4: #{lossbalnet_clf_forward.1} parent=1 // loop_header_branch
      %20 = sbr.rel (%p18) target = $region8
    $region5: #{lossbalnet_clf_forward.1} parent=1 // loop_body
      %s22 = ssub.s32 %s17, 1
      %s23 = ssub.s32 %s17, 2
      %s30 = sadd.s32 1, %s25
      %p31 = scmp.ge.s32.totalorder %s30, 2
      %s32 = scalar_select %p31, 0, %s30
      %s33 = sadd.s32 1, %s24
      %s34 = scalar_select %p31, %s33, %s24
      %p35 = scmp.ge.s32.totalorder %s34, 2
      %s36 = scalar_select %p35, 0, %s34
      %s37 = ssub.s32 %s24, %s36
      %s38 = ssub.s32 %s25, %s32
      %s39 = sor.u32 %s37, %s38
      %p40 = scmp.eq.s32.totalorder %s39, 0
      %s42 = sadd.s32 %s41, 1
      %s43 = scalar_select %p40, %s41, %s42
      %p46 = pneg %p40
      %p47 = scmp.eq.s32.totalorder %s17, 3
      %p48 = por %p46, %p47
      %p49 = scmp.ne.s32.totalorder %s41, %s44
      %p50 = scmp.eq.s32.totalorder %s17, 0
      %p51 = por %p49, %p50
      %p52 = scmp.ne.s32.totalorder %s41, %s44
      %p53 = scmp.eq.s32.totalorder %s22, 3
      %p54 = por %p52, %p53
      %p55 = scmp.ne.s32.totalorder %s44, %s45
      %p56 = scmp.eq.s32.totalorder %s22, 0
      %p57 = por %p55, %p56
      %p58 = scmp.ne.s32.totalorder %s44, %s45
      %p59 = scmp.eq.s32.totalorder %s23, 3
      %p60 = por %p58, %p59
      %p62 = scmp.ne.s32.totalorder %s45, %s61
      %p63 = scmp.eq.s32.totalorder %s23, 0
      %p64 = por %p62, %p63
      %s66 = sadd.s32 %s65, 1
      %p69 = scmp.eq.s32.totalorder %s17, 3
      %p70 = scmp.ne.s32.totalorder %s65, %s67
      %p71 = scmp.eq.s32.totalorder %s17, 0
      %p72 = por %p70, %p71
      %p73 = scmp.ne.s32.totalorder %s65, %s67
      %p74 = scmp.eq.s32.totalorder %s22, 3
      %p75 = por %p73, %p74
      %p76 = scmp.ne.s32.totalorder %s67, %s68
      %p77 = scmp.eq.s32.totalorder %s22, 0
      %p78 = por %p76, %p77
      %p79 = scmp.ne.s32.totalorder %s67, %s68
      %p80 = scmp.eq.s32.totalorder %s23, 3
      %p81 = por %p79, %p80
      %p83 = scmp.ne.s32.totalorder %s68, %s82
      %p84 = scmp.eq.s32.totalorder %s23, 0
      %p85 = por %p83, %p84
      %s87 = sadd.s32 %s86, 1
      %p90 = scmp.eq.s32.totalorder %s17, 3
      %p91 = scmp.ne.s32.totalorder %s86, %s88
      %p92 = scmp.eq.s32.totalorder %s17, 0
      %p93 = por %p91, %p92
      %p94 = scmp.ne.s32.totalorder %s86, %s88
      %p95 = scmp.eq.s32.totalorder %s22, 3
      %p96 = por %p94, %p95
      %p97 = scmp.ne.s32.totalorder %s88, %s89
      %p98 = scmp.eq.s32.totalorder %s22, 0
      %p99 = por %p97, %p98
      %p100 = scmp.ne.s32.totalorder %s88, %s89
      %p101 = scmp.eq.s32.totalorder %s23, 3
      %p102 = por %p100, %p101
      %p104 = scmp.ne.s32.totalorder %s89, %s103
      %p105 = scmp.eq.s32.totalorder %s23, 0
      %p106 = por %p104, %p105
      %s108 = sadd.s32 %s107, 1
      %p111 = scmp.eq.s32.totalorder %s17, 3
      %p112 = scmp.ne.s32.totalorder %s107, %s109
      %p113 = scmp.eq.s32.totalorder %s17, 0
      %p114 = por %p112, %p113
      %p115 = scmp.ne.s32.totalorder %s107, %s109
      %p116 = scmp.eq.s32.totalorder %s22, 3
      %p117 = por %p115, %p116
      %p118 = scmp.ne.s32.totalorder %s109, %s110
      %p119 = scmp.eq.s32.totalorder %s22, 0
      %p120 = por %p118, %p119
      %p121 = scmp.ne.s32.totalorder %s109, %s110
      %p122 = scmp.eq.s32.totalorder %s23, 3
      %p123 = por %p121, %p122
      %p125 = scmp.ne.s32.totalorder %s110, %s124
      %p126 = scmp.eq.s32.totalorder %s23, 0
      %p127 = por %p125, %p126
      %s129 = sadd.s32 %s128, 1
      %p132 = scmp.eq.s32.totalorder %s17, 3
      %p133 = scmp.ne.s32.totalorder %s128, %s130
      %p134 = scmp.eq.s32.totalorder %s17, 0
      %p135 = por %p133, %p134
      %p136 = scmp.ne.s32.totalorder %s128, %s130
      %p137 = scmp.eq.s32.totalorder %s22, 3
      %p138 = por %p136, %p137
      %p139 = scmp.ne.s32.totalorder %s130, %s131
      %p140 = scmp.eq.s32.totalorder %s22, 0
      %p141 = por %p139, %p140
      %p142 = scmp.ne.s32.totalorder %s130, %s131
      %p143 = scmp.eq.s32.totalorder %s23, 3
      %p144 = por %p142, %p143
      %p146 = scmp.ne.s32.totalorder %s131, %s145
      %p147 = scmp.eq.s32.totalorder %s23, 0
      %p148 = por %p146, %p147
      %s150 = sadd.s32 %s149, 1
      %p153 = scmp.eq.s32.totalorder %s17, 3
      %p154 = scmp.ne.s32.totalorder %s149, %s151
      %p155 = scmp.eq.s32.totalorder %s17, 0
      %p156 = por %p154, %p155
      %p157 = scmp.ne.s32.totalorder %s149, %s151
      %p158 = scmp.eq.s32.totalorder %s22, 3
      %p159 = por %p157, %p158
      %p160 = scmp.ne.s32.totalorder %s151, %s152
      %p161 = scmp.eq.s32.totalorder %s22, 0
      %p162 = por %p160, %p161
      %p163 = scmp.ne.s32.totalorder %s151, %s152
      %p164 = scmp.eq.s32.totalorder %s23, 3
      %p165 = por %p163, %p164
      %p167 = scmp.ne.s32.totalorder %s152, %s166
      %p168 = scmp.eq.s32.totalorder %s23, 0
      %p169 = por %p167, %p168
      %s171 = sadd.s32 %s170, 1
      %p174 = scmp.eq.s32.totalorder %s17, 3
      %p175 = scmp.ne.s32.totalorder %s170, %s172
      %p176 = scmp.eq.s32.totalorder %s17, 0
      %p177 = por %p175, %p176
      %p178 = scmp.ne.s32.totalorder %s170, %s172
      %p179 = scmp.eq.s32.totalorder %s22, 3
      %p180 = por %p178, %p179
      %p181 = scmp.ne.s32.totalorder %s172, %s173
      %p182 = scmp.eq.s32.totalorder %s22, 0
      %p183 = por %p181, %p182
      %p184 = scmp.ne.s32.totalorder %s172, %s173
      %p185 = scmp.eq.s32.totalorder %s23, 3
      %p186 = por %p184, %p185
      %p188 = scmp.ne.s32.totalorder %s173, %s187
      %p189 = scmp.eq.s32.totalorder %s23, 0
      %p190 = por %p188, %p189
      %s192 = sadd.s32 %s191, 1
      %p195 = scmp.eq.s32.totalorder %s17, 3
      %p196 = scmp.ne.s32.totalorder %s191, %s193
      %p197 = scmp.eq.s32.totalorder %s17, 0
      %p198 = por %p196, %p197
      %p199 = scmp.ne.s32.totalorder %s191, %s193
      %p200 = scmp.eq.s32.totalorder %s22, 3
      %p201 = por %p199, %p200
      %p202 = scmp.ne.s32.totalorder %s193, %s194
      %p203 = scmp.eq.s32.totalorder %s22, 0
      %p204 = por %p202, %p203
      %p205 = scmp.ne.s32.totalorder %s193, %s194
      %p206 = scmp.eq.s32.totalorder %s23, 3
      %p207 = por %p205, %p206
      %p209 = scmp.ne.s32.totalorder %s194, %s208
      %p210 = scmp.eq.s32.totalorder %s23, 0
      %p211 = por %p209, %p210
      %s212 = ssub.s32 %s24, %s36
      %p213 = scmp.eq.s32.totalorder %s212, 0
      %s215 = sadd.s32 %s214, 1
      %s216 = scalar_select %p213, %s214, %s215
      %p219 = pneg %p213
      %p220 = scmp.eq.s32.totalorder %s17, 3
      %p221 = por %p219, %p220
      %p222 = scmp.ne.s32.totalorder %s214, %s217
      %p223 = scmp.eq.s32.totalorder %s17, 0
      %p224 = por %p222, %p223
      %p225 = scmp.ne.s32.totalorder %s214, %s217
      %p226 = scmp.eq.s32.totalorder %s22, 3
      %p227 = por %p225, %p226
      %p228 = scmp.ne.s32.totalorder %s217, %s218
      %p229 = scmp.eq.s32.totalorder %s22, 0
      %p230 = por %p228, %p229
      %p231 = scmp.ne.s32.totalorder %s217, %s218
      %p232 = scmp.eq.s32.totalorder %s23, 3
      %p233 = por %p231, %p232
      %p235 = scmp.ne.s32.totalorder %s218, %s234
      %p236 = scmp.eq.s32.totalorder %s23, 0
      %p237 = por %p235, %p236
      %p238 = scmp.le.s32.totalorder 1, %s17
      %p239 = scmp.lt.s32.totalorder %s17, 5
      %p240 = pnand %p238, %p239
      %p241 = pneg %p240
      // Predicated region
      $region9: #{lossbalnet_clf_forward.1} parent=5 // pred_check
        _
      $region10: #{lossbalnet_clf_forward.1} parent=5 // pred_check_branch
        %243 = sbr.rel (%p240) target = $region12
      $region11: #{lossbalnet_clf_forward.1} parent=5 // pred_region
        %s244 = ssub.s32 %s17, 1
        // Predicated region
        $region13: #{lossbalnet_clf_forward.1} parent=11 // pred_check
          %p245 = pneg %p78
        $region14: #{lossbalnet_clf_forward.1} parent=11 // pred_check_branch
          %247 = sbr.rel (%p245) target = $region16
        $region15: #{lossbalnet_clf_forward.1} parent=11 // pred_region
          _
        $region16: #{lossbalnet_clf_forward.1} parent=11 // pred_fallthru
          _
        // Predicated region
        $region17: #{lossbalnet_clf_forward.1} parent=11 // pred_check
          %p248 = pneg %p99
        $region18: #{lossbalnet_clf_forward.1} parent=11 // pred_check_branch
          %250 = sbr.rel (%p248) target = $region20
        $region19: #{lossbalnet_clf_forward.1} parent=11 // pred_region
          _
        $region20: #{lossbalnet_clf_forward.1} parent=11 // pred_fallthru
          _
        // Predicated region
        $region21: #{lossbalnet_clf_forward.1} parent=11 // pred_check
          %p251 = pneg %p120
        $region22: #{lossbalnet_clf_forward.1} parent=11 // pred_check_branch
          %253 = sbr.rel (%p251) target = $region24
        $region23: #{lossbalnet_clf_forward.1} parent=11 // pred_region
          _
        $region24: #{lossbalnet_clf_forward.1} parent=11 // pred_fallthru
          _
        // Predicated region
        $region25: #{lossbalnet_clf_forward.1} parent=11 // pred_check
          %p254 = pneg %p141
        $region26: #{lossbalnet_clf_forward.1} parent=11 // pred_check_branch
          %256 = sbr.rel (%p254) target = $region28
        $region27: #{lossbalnet_clf_forward.1} parent=11 // pred_region
          _
        $region28: #{lossbalnet_clf_forward.1} parent=11 // pred_fallthru
          _
        // Predicated region
        $region29: #{lossbalnet_clf_forward.1} parent=11 // pred_check
          %p257 = pneg %p162
        $region30: #{lossbalnet_clf_forward.1} parent=11 // pred_check_branch
          %259 = sbr.rel (%p257) target = $region32
        $region31: #{lossbalnet_clf_forward.1} parent=11 // pred_region
          _
        $region32: #{lossbalnet_clf_forward.1} parent=11 // pred_fallthru
          _
        // Predicated region
        $region33: #{lossbalnet_clf_forward.1} parent=11 // pred_check
          %p260 = pneg %p183
        $region34: #{lossbalnet_clf_forward.1} parent=11 // pred_check_branch
          %262 = sbr.rel (%p260) target = $region36
        $region35: #{lossbalnet_clf_forward.1} parent=11 // pred_region
          _
        $region36: #{lossbalnet_clf_forward.1} parent=11 // pred_fallthru
          _
        // Predicated region
        $region37: #{lossbalnet_clf_forward.1} parent=11 // pred_check
          %p263 = pneg %p204
        $region38: #{lossbalnet_clf_forward.1} parent=11 // pred_check_branch
          %265 = sbr.rel (%p263) target = $region40
        $region39: #{lossbalnet_clf_forward.1} parent=11 // pred_region
          _
        $region40: #{lossbalnet_clf_forward.1} parent=11 // pred_fallthru
          _
      $region12: #{lossbalnet_clf_forward.1} parent=5 // pred_fallthru
        _
      %p266 = scmp.lt.s32.totalorder %s17, 4
      // Predicated region
      $region41: #{lossbalnet_clf_forward.1} parent=5 // pred_check
        %p267 = pneg %p266
      $region42: #{lossbalnet_clf_forward.1} parent=5 // pred_check_branch
        %269 = sbr.rel (%p267) target = $region44
      $region43: #{lossbalnet_clf_forward.1} parent=5 // pred_region
        // Predicated region
        $region45: #{lossbalnet_clf_forward.1} parent=43 // pred_check
          %p270 = pneg %p51
        $region46: #{lossbalnet_clf_forward.1} parent=43 // pred_check_branch
          %272 = sbr.rel (%p270) target = $region48
        $region47: #{lossbalnet_clf_forward.1} parent=43 // pred_region
          %s273 = smul.u32 16, %s25
          %p274 = scmp.lt.s32.totalorder %s24, 1
          %s275 = scalar_select %p274, %s24, 1
          %p276 = scmp.lt.s32.totalorder %s273, 31
          %s277 = scalar_select %p276, %s273, 31
          %s278 = smul.addr %s275, 32
          %s279 = sadd.s32 %s277, %s278
          %s280 = smul.addr %s279, 4
          %s281 = scalar_lea.vmem %s0, %s280
          %s282 = smul.u32 16, %s25
        $region48: #{lossbalnet_clf_forward.1} parent=43 // pred_fallthru
          _
      $region44: #{lossbalnet_clf_forward.1} parent=5 // pred_fallthru
        _
      %p283 = scmp.le.s32.totalorder 1, %s17
      %p284 = scmp.lt.s32.totalorder %s17, 5
      %p285 = pnand %p283, %p284
      %p286 = pneg %p285
      // Predicated region
      $region49: #{lossbalnet_clf_forward.1} parent=5 // pred_check
        _
      $region50: #{lossbalnet_clf_forward.1} parent=5 // pred_check_branch
        %288 = sbr.rel (%p285) target = $region52
      $region51: #{lossbalnet_clf_forward.1} parent=5 // pred_region
        %s289 = ssub.s32 %s17, 1
        %s290 = smul.u32 16, %s27
        %p291 = scmp.lt.s32.totalorder %s26, 1
        %s292 = scalar_select %p291, %s26, 1
        %p293 = scmp.lt.s32.totalorder %s290, 31
        %s294 = scalar_select %p293, %s290, 31
        %s295 = smul.addr %s292, 32
        %s296 = sadd.s32 %s294, %s295
        %s297 = smul.addr %s296, 4
        %s298 = scalar_lea.vmem %s0, %s297
        %p299 = pneg %p57
        %p300 = pneg %p54
        %p301 = pneg %p78
        %p302 = pneg %p75
        %p303 = pneg %p99
        %p304 = pneg %p96
        %p305 = pneg %p120
        %p306 = pneg %p117
        %p307 = pneg %p141
        %p308 = pneg %p138
        %p309 = pneg %p162
        %p310 = pneg %p159
        %p311 = pneg %p183
        %p312 = pneg %p180
        %p313 = pneg %p204
        %p314 = pneg %p201
        %p315 = pneg %p230
        %p316 = pneg %p227
        %s317 = sand.u32 %s217, 1
        %s318 = scalar_lea.sflag [#allocation4], %s317
        %s319 = sand.u32 %s217, 1
        %s320 = scalar_lea.vmem [#allocation3], %s319
        %s321 = smul.u32 16, %s27
        %p322 = scmp.lt.s32.totalorder %s26, 1
        %s323 = scalar_select %p322, %s26, 1
        %p324 = scmp.lt.s32.totalorder %s321, 31
        %s325 = scalar_select %p324, %s321, 31
        %s326 = smul.addr %s323, 32
        %s327 = sadd.s32 %s325, %s326
        %s328 = smul.addr %s327, 4
        %s329 = scalar_lea.vmem %s0, %s328
        %s330 = smul.u32 16, %s27
        %p332 = scmp.eq.s32.totalorder %s27, 0
        // Predicated region
        $region53: #{lossbalnet_clf_forward.1} parent=51 // pred_check
          %p333 = pneg %p332
        $region54: #{lossbalnet_clf_forward.1} parent=51 // pred_check_branch
          %335 = sbr.rel (%p333) target = $region56
        $region55: #{lossbalnet_clf_forward.1} parent=51 // pred_region
          %336 = vst [vmem:[#allocation2] sm:$0x1] 0.0
        $region56: #{lossbalnet_clf_forward.1} parent=51 // pred_fallthru
          _
        %v337 = vld [vmem:[%s329] sm:$0xf]
        %v338 = vld [vmem:[%s329 + $0x4] sm:$0xf]
        %v339 = vld [vmem:[%s329 + $0x8] sm:$0xf]
        %v340 = vld [vmem:[%s329 + $0xc] sm:$0xf]
        %v341 = vld [vmem:[%s329 + $0x10] sm:$0xf]
        %v342 = vld [vmem:[%s329 + $0x14] sm:$0xf]
        %v343 = vld [vmem:[%s329 + $0x18] sm:$0xf]
        %v344 = vld [vmem:[%s329 + $0x1c] sm:$0xf]
        %v345 = vld [vmem:[%s329 + $0x20] sm:$0xf]
        %v346 = vld [vmem:[%s329 + $0x24] sm:$0xf]
        %v347 = vld [vmem:[%s329 + $0x28] sm:$0xf]
        %v348 = vld [vmem:[%s329 + $0x2c] sm:$0xf]
        %v349 = vld [vmem:[%s329 + $0x30] sm:$0xf]
        %v350 = vld [vmem:[%s329 + $0x34] sm:$0xf]
        %v351 = vld [vmem:[%s329 + $0x38] sm:$0xf]
        %v352 = vld [vmem:[%s329 + $0x3c] sm:$0xf]
        %v353 = vld [vmem:[%s1] sm:$0xf]
        %v354 = vld [vmem:[%s1 + $0x4] sm:$0xf]
        %v355 = vld [vmem:[%s1 + $0x8] sm:$0xf]
        %v356 = vld [vmem:[%s1 + $0xc] sm:$0x3]
        %v373 = vunpack.c.l.b16 %v337
        %v374 = vunpack.c.l.b16 %v338
        %v375 = vunpack.c.l.b16 %v339
        %v376 = vunpack.c.l.b16 %v340
        %v377 = vunpack.c.l.b16 %v341
        %v378 = vunpack.c.l.b16 %v342
        %v379 = vunpack.c.l.b16 %v343
        %v380 = vunpack.c.l.b16 %v344
        %v381 = vunpack.c.l.b16 %v345
        %v382 = vunpack.c.l.b16 %v346
        %v383 = vunpack.c.l.b16 %v347
        %v384 = vunpack.c.l.b16 %v348
        %v385 = vunpack.c.l.b16 %v349
        %v386 = vunpack.c.l.b16 %v350
        %v387 = vunpack.c.l.b16 %v351
        %v388 = vunpack.c.l.b16 %v352
        %v389 = vpack.c.b16 %v374, %v373
        %v390 = vpack.c.b16 %v376, %v375
        %v391 = vpack.c.b16 %v378, %v377
        %v392 = vpack.c.b16 %v380, %v379
        %v393 = vpack.c.b16 %v382, %v381
        %v394 = vpack.c.b16 %v384, %v383
        %v395 = vpack.c.b16 %v386, %v385
        %v396 = vpack.c.b16 %v388, %v387
        %v401 = vunpack.c.l.b16 %v353
        %v402 = vunpack.c.l.b16 %v354
        %v403 = vunpack.c.l.b16 %v355
        %v404 = vunpack.c.l.b16 %v356
        %v405 = vpack.c.b16 %v402, %v401
        %v406 = vpack.c.b16 %v404, %v403
        %vm408 = vcmask 220160
        %v410 = vsel %vm408, %v389, 0
        %v413 = vsel %vm408, %v390, 0
        %v416 = vsel %vm408, %v391, 0
        %v419 = vsel %vm408, %v392, 0
        %v422 = vsel %vm408, %v393, 0
        %v425 = vsel %vm408, %v394, 0
        %v428 = vsel %vm408, %v395, 0
        %v431 = vsel %vm408, %v396, 0
        %vm433 = vcmask 1044480
        %vm434 = vcmask 1045504
        %v435 = vsel %vm433, 4294967295, 65535
        %v436 = vsel %vm434, %v435, 0
        %v438 = vand.u32 %v406, %v436
        %440 = vmatpush.bf16.msra.mxu0 0
        %441 = vmatpush.bf16.msra.mxu0 0
        %442 = vmatpush.bf16.msra.mxu0 0
        %443 = vmatpush.bf16.msra.mxu0 0
        %444 = vmatpush.bf16.msra.mxu0 0
        %445 = vmatpush.bf16.msra.mxu0 0
        %446 = vmatpush.bf16.msra.mxu0 %v438
        %447 = vmatpush.bf16.msra.mxu0 %v405
        %448 = vmatmul.bf16.gmra.mxu0 %v410
        %v449 = vpop.f32.mrf.mxu0
        %v450 = vadd.f32 0.0, %v449
        %v451 = vpop.f32.mrf.mxu0
        %v452 = vadd.f32 0.0, %v451
        %453 = vmatmul.bf16.gmra.mxu0 %v413
        %v454 = vpop.f32.mrf.mxu0
        %v455 = vadd.f32 0.0, %v454
        %v456 = vpop.f32.mrf.mxu0
        %v457 = vadd.f32 0.0, %v456
        %458 = vmatmul.bf16.gmra.mxu0 %v416
        %v459 = vpop.f32.mrf.mxu0
        %v460 = vadd.f32 0.0, %v459
        %v461 = vpop.f32.mrf.mxu0
        %v462 = vadd.f32 0.0, %v461
        %463 = vmatmul.bf16.gmra.mxu0 %v419
        %v464 = vpop.f32.mrf.mxu0
        %v465 = vadd.f32 0.0, %v464
        %v466 = vpop.f32.mrf.mxu0
        %v467 = vadd.f32 0.0, %v466
        %468 = vmatmul.bf16.gmra.mxu0 %v422
        %v469 = vpop.f32.mrf.mxu0
        %v470 = vadd.f32 0.0, %v469
        %v471 = vpop.f32.mrf.mxu0
        %v472 = vadd.f32 0.0, %v471
        %473 = vmatmul.bf16.gmra.mxu0 %v425
        %v474 = vpop.f32.mrf.mxu0
        %v475 = vadd.f32 0.0, %v474
        %v476 = vpop.f32.mrf.mxu0
        %v477 = vadd.f32 0.0, %v476
        %478 = vmatmul.bf16.gmra.mxu0 %v428
        %v479 = vpop.f32.mrf.mxu0
        %v480 = vadd.f32 0.0, %v479
        %v481 = vpop.f32.mrf.mxu0
        %v482 = vadd.f32 0.0, %v481
        %483 = vmatmul.bf16.gmra.mxu0 %v431
        %v484 = vpop.f32.mrf.mxu0
        %v485 = vadd.f32 0.0, %v484
        %v486 = vpop.f32.mrf.mxu0
        %v487 = vadd.f32 0.0, %v486
        %488 = vdwg.mxu0
        %v489 = vld [vmem:[%s2] sm:$0x1]
        %v491 = vperm.slane %v489, 0
        %v493 = vmul.f32 %v450, %v491
        %v494 = vmul.f32 %v452, %v491
        %v495 = vmul.f32 %v455, %v491
        %v496 = vmul.f32 %v457, %v491
        %v497 = vmul.f32 %v460, %v491
        %v498 = vmul.f32 %v462, %v491
        %v499 = vmul.f32 %v465, %v491
        %v500 = vmul.f32 %v467, %v491
        %v501 = vmul.f32 %v470, %v491
        %v502 = vmul.f32 %v472, %v491
        %v503 = vmul.f32 %v475, %v491
        %v504 = vmul.f32 %v477, %v491
        %v505 = vmul.f32 %v480, %v491
        %v506 = vmul.f32 %v482, %v491
        %v507 = vmul.f32 %v485, %v491
        %v508 = vmul.f32 %v487, %v491
        %v509 = vld [vmem:[%s3] sm:$0x1]
        %v511 = vperm.slane %v509, 0
        %v513 = vadd.f32 %v493, %v511
        %v514 = vadd.f32 %v494, %v511
        %v515 = vadd.f32 %v495, %v511
        %v516 = vadd.f32 %v496, %v511
        %v517 = vadd.f32 %v497, %v511
        %v518 = vadd.f32 %v498, %v511
        %v519 = vadd.f32 %v499, %v511
        %v520 = vadd.f32 %v500, %v511
        %v521 = vadd.f32 %v501, %v511
        %v522 = vadd.f32 %v502, %v511
        %v523 = vadd.f32 %v503, %v511
        %v524 = vadd.f32 %v504, %v511
        %v525 = vadd.f32 %v505, %v511
        %v526 = vadd.f32 %v506, %v511
        %v527 = vadd.f32 %v507, %v511
        %v528 = vadd.f32 %v508, %v511
        %v529 = vmax.f32 %v513, 0.0
        %v530 = vmax.f32 %v514, 0.0
        %v531 = vmax.f32 %v515, 0.0
        %v532 = vmax.f32 %v516, 0.0
        %v533 = vmax.f32 %v517, 0.0
        %v534 = vmax.f32 %v518, 0.0
        %v535 = vmax.f32 %v519, 0.0
        %v536 = vmax.f32 %v520, 0.0
        %v537 = vmax.f32 %v521, 0.0
        %v538 = vmax.f32 %v522, 0.0
        %v539 = vmax.f32 %v523, 0.0
        %v540 = vmax.f32 %v524, 0.0
        %v541 = vmax.f32 %v525, 0.0
        %v542 = vmax.f32 %v526, 0.0
        %v543 = vmax.f32 %v527, 0.0
        %v544 = vmax.f32 %v528, 0.0
        %v545 = vpack.c.bf16 %v530, %v529
        %v546 = vpack.c.bf16 %v532, %v531
        %v547 = vpack.c.bf16 %v534, %v533
        %v548 = vpack.c.bf16 %v536, %v535
        %v549 = vpack.c.bf16 %v538, %v537
        %v550 = vpack.c.bf16 %v540, %v539
        %v551 = vpack.c.bf16 %v542, %v541
        %v552 = vpack.c.bf16 %v544, %v543
        %v553 = vld [vmem:[%s4] sm:$0xf]
        %v554 = vld [vmem:[%s4 + $0x4] sm:$0xf]
        %v555 = vld [vmem:[%s4 + $0x8] sm:$0xf]
        %v556 = vld [vmem:[%s4 + $0xc] sm:$0xf]
        %v557 = vld [vmem:[%s4 + $0x10] sm:$0xf]
        %v558 = vld [vmem:[%s4 + $0x14] sm:$0xf]
        %v559 = vld [vmem:[%s4 + $0x18] sm:$0xf]
        %v560 = vld [vmem:[%s4 + $0x1c] sm:$0xf]
        %v561 = vld [vmem:[%s4 + $0x20] sm:$0xf]
        %v562 = vld [vmem:[%s4 + $0x24] sm:$0xf]
        %v563 = vld [vmem:[%s4 + $0x28] sm:$0xf]
        %v564 = vld [vmem:[%s4 + $0x2c] sm:$0xf]
        %v565 = vld [vmem:[%s4 + $0x30] sm:$0xf]
        %v566 = vld [vmem:[%s4 + $0x34] sm:$0xf]
        %v567 = vld [vmem:[%s4 + $0x38] sm:$0xf]
        %v568 = vld [vmem:[%s4 + $0x3c] sm:$0xf]
        %v569 = vld [vmem:[%s5] sm:$0x1]
        %v571 = vperm.slane %v569, 0
        %v589 = vunpack.c.l.b16 %v553
        %v590 = vunpack.c.l.b16 %v554
        %v591 = vunpack.c.l.b16 %v555
        %v592 = vunpack.c.l.b16 %v556
        %v593 = vunpack.c.l.b16 %v557
        %v594 = vunpack.c.l.b16 %v558
        %v595 = vunpack.c.l.b16 %v559
        %v596 = vunpack.c.l.b16 %v560
        %v597 = vunpack.c.l.b16 %v561
        %v598 = vunpack.c.l.b16 %v562
        %v599 = vunpack.c.l.b16 %v563
        %v600 = vunpack.c.l.b16 %v564
        %v601 = vunpack.c.l.b16 %v565
        %v602 = vunpack.c.l.b16 %v566
        %v603 = vunpack.c.l.b16 %v567
        %v604 = vunpack.c.l.b16 %v568
        %v605 = vpack.c.b16 %v590, %v589
        %v606 = vpack.c.b16 %v592, %v591
        %v607 = vpack.c.b16 %v594, %v593
        %v608 = vpack.c.b16 %v596, %v595
        %v609 = vpack.c.b16 %v598, %v597
        %v610 = vpack.c.b16 %v600, %v599
        %v611 = vpack.c.b16 %v602, %v601
        %v612 = vpack.c.b16 %v604, %v603
        %621 = vmatpush.bf16.msra.mxu0 %v612
        %622 = vmatpush.bf16.msra.mxu0 %v611
        %623 = vmatpush.bf16.msra.mxu0 %v610
        %624 = vmatpush.bf16.msra.mxu0 %v609
        %625 = vmatpush.bf16.msra.mxu0 %v608
        %626 = vmatpush.bf16.msra.mxu0 %v607
        %627 = vmatpush.bf16.msra.mxu0 %v606
        %628 = vmatpush.bf16.msra.mxu0 %v605
        %629 = vmatmul.bf16.gmra.mxu0 %v545
        %v630 = vpop.f32.mrf.mxu0
        %v631 = vadd.f32 %v571, %v630
        %v632 = vpop.f32.mrf.mxu0
        %v633 = vadd.f32 %v571, %v632
        %634 = vmatmul.bf16.gmra.mxu0 %v546
        %v635 = vpop.f32.mrf.mxu0
        %v636 = vadd.f32 %v571, %v635
        %v637 = vpop.f32.mrf.mxu0
        %v638 = vadd.f32 %v571, %v637
        %639 = vmatmul.bf16.gmra.mxu0 %v547
        %v640 = vpop.f32.mrf.mxu0
        %v641 = vadd.f32 %v571, %v640
        %v642 = vpop.f32.mrf.mxu0
        %v643 = vadd.f32 %v571, %v642
        %644 = vmatmul.bf16.gmra.mxu0 %v548
        %v645 = vpop.f32.mrf.mxu0
        %v646 = vadd.f32 %v571, %v645
        %v647 = vpop.f32.mrf.mxu0
        %v648 = vadd.f32 %v571, %v647
        %649 = vmatmul.bf16.gmra.mxu0 %v549
        %v650 = vpop.f32.mrf.mxu0
        %v651 = vadd.f32 %v571, %v650
        %v652 = vpop.f32.mrf.mxu0
        %v653 = vadd.f32 %v571, %v652
        %654 = vmatmul.bf16.gmra.mxu0 %v550
        %v655 = vpop.f32.mrf.mxu0
        %v656 = vadd.f32 %v571, %v655
        %v657 = vpop.f32.mrf.mxu0
        %v658 = vadd.f32 %v571, %v657
        %659 = vmatmul.bf16.gmra.mxu0 %v551
        %v660 = vpop.f32.mrf.mxu0
        %v661 = vadd.f32 %v571, %v660
        %v662 = vpop.f32.mrf.mxu0
        %v663 = vadd.f32 %v571, %v662
        %664 = vmatmul.bf16.gmra.mxu0 %v552
        %v665 = vpop.f32.mrf.mxu0
        %v666 = vadd.f32 %v571, %v665
        %v667 = vpop.f32.mrf.mxu0
        %v668 = vadd.f32 %v571, %v667
        %669 = vdwg.mxu0
        %v670 = vmax.f32 %v631, 0.0
        %v671 = vmax.f32 %v633, 0.0
        %v672 = vmax.f32 %v636, 0.0
        %v673 = vmax.f32 %v638, 0.0
        %v674 = vmax.f32 %v641, 0.0
        %v675 = vmax.f32 %v643, 0.0
        %v676 = vmax.f32 %v646, 0.0
        %v677 = vmax.f32 %v648, 0.0
        %v678 = vmax.f32 %v651, 0.0
        %v679 = vmax.f32 %v653, 0.0
        %v680 = vmax.f32 %v656, 0.0
        %v681 = vmax.f32 %v658, 0.0
        %v682 = vmax.f32 %v661, 0.0
        %v683 = vmax.f32 %v663, 0.0
        %v684 = vmax.f32 %v666, 0.0
        %v685 = vmax.f32 %v668, 0.0
        %v686 = vld [vmem:[#allocation2] sm:$0x1]
        %v687 = vadd.f32 %v670, %v671
        %v688 = vadd.f32 %v687, %v672
        %v689 = vadd.f32 %v688, %v673
        %v690 = vadd.f32 %v689, %v674
        %v691 = vadd.f32 %v690, %v675
        %v692 = vadd.f32 %v691, %v676
        %v693 = vadd.f32 %v692, %v677
        %v694 = vadd.f32 %v693, %v678
        %v695 = vadd.f32 %v694, %v679
        %v696 = vadd.f32 %v695, %v680
        %v697 = vadd.f32 %v696, %v681
        %v698 = vadd.f32 %v697, %v682
        %v699 = vadd.f32 %v698, %v683
        %v700 = vadd.f32 %v699, %v684
        %v701 = vadd.f32 %v700, %v685
        %v702 = vrot.slane %v701, 4
        %v703 = vadd.f32 %v701, %v702
        %v704 = vrot.slane %v703, 2
        %v705 = vadd.f32 %v703, %v704
        %v706 = vrot.slane %v705, 1
        %v707 = vadd.f32 %v705, %v706
        %v708 = vadd.f32 %v686, %v707
        %709 = vst [vmem:[#allocation2] sm:$0x1] %v708
        %p710 = scmp.eq.s32.totalorder %s27, 1
        // Predicated region
        $region57: #{lossbalnet_clf_forward.1} parent=51 // pred_check
          %p711 = pneg %p710
        $region58: #{lossbalnet_clf_forward.1} parent=51 // pred_check_branch
          %713 = sbr.rel (%p711) target = $region60
        $region59: #{lossbalnet_clf_forward.1} parent=51 // pred_region
          %v714 = vld [vmem:[#allocation2] sm:$0x1]
          %v715 = vmul.f32 %v714, 0.00390625
          %v716 = vld [vmem:[%s6] sm:$0xff]
          %v717 = vld [vmem:[%s6 + $0x8] sm:$0xff]
          %v718 = vld [vmem:[%s6 + $0x10] sm:$0xff]
          %v719 = vld [vmem:[%s6 + $0x18] sm:$0xff]
          %v720 = vld [vmem:[%s6 + $0x20] sm:$0xff]
          %v721 = vld [vmem:[%s6 + $0x28] sm:$0xff]
          %v722 = vld [vmem:[%s6 + $0x30] sm:$0xff]
          %v723 = vld [vmem:[%s6 + $0x38] sm:$0xff]
          %v724 = vld [vmem:[%s6 + $0x40] sm:$0xff]
          %v725 = vld [vmem:[%s6 + $0x48] sm:$0xff]
          %v726 = vld [vmem:[%s6 + $0x50] sm:$0xff]
          %v727 = vld [vmem:[%s6 + $0x58] sm:$0xff]
          %v728 = vld [vmem:[%s6 + $0x60] sm:$0xff]
          %v729 = vld [vmem:[%s6 + $0x68] sm:$0xff]
          %v730 = vld [vmem:[%s6 + $0x70] sm:$0xff]
          %v731 = vld [vmem:[%s6 + $0x78] sm:$0xff]
          %v732 = vld [vmem:[%s7] sm:$0x1]
          %733 = vmatpush.msra.mxu0 %v731
          %734 = vmatpush.msra.mxu0 %v730
          %735 = vmatpush.msra.mxu0 %v729
          %736 = vmatpush.msra.mxu0 %v728
          %737 = vmatpush.msra.mxu0 %v727
          %738 = vmatpush.msra.mxu0 %v726
          %739 = vmatpush.msra.mxu0 %v725
          %740 = vmatpush.msra.mxu0 %v724
          %741 = vmatpush.msra.mxu0 %v723
          %742 = vmatpush.msra.mxu0 %v722
          %743 = vmatpush.msra.mxu0 %v721
          %744 = vmatpush.msra.mxu0 %v720
          %745 = vmatpush.msra.mxu0 %v719
          %746 = vmatpush.msra.mxu0 %v718
          %747 = vmatpush.msra.mxu0 %v717
          %748 = vmatpush.msra.mxu0 %v716
          %749 = vmatmul.f32.gmra.mxu0 %v715
          %v750 = vpop.f32.mrf.mxu0
          %v751 = vadd.f32 %v732, %v750
          %752 = vdwg.mxu0
          %753 = vst [vmem:[%s320] sm:$0x1] %v751
        $region60: #{lossbalnet_clf_forward.1} parent=51 // pred_fallthru
          _
        %s754 = sand.u32 %s217, 1
        %s755 = scalar_lea.sflag [#allocation4], %s754
        %s756 = sand.u32 %s217, 1
        %s757 = scalar_lea.vmem [#allocation3], %s756
        // Predicated region
        $region61: #{lossbalnet_clf_forward.1} parent=51 // pred_check
          %p758 = pneg %p227
        $region62: #{lossbalnet_clf_forward.1} parent=51 // pred_check_branch
          %760 = sbr.rel (%p758) target = $region64
        $region63: #{lossbalnet_clf_forward.1} parent=51 // pred_region
          %762 = vsyncadd %s755, 0
          %s763 = scalar_lea.hbm %s8, %s26
          %s765 = sshll.u32 %s757, 4
          %s766 = int_to_ptr.vmem [resolvable:$true] %s765
          %s767 = sshll.u32 %s763, 4
          %s768 = int_to_ptr.hbm [resolvable:$true] %s767
          %770 = dma.vmem_to_hbm [thread:$0]  %s766, 16, %s768, %s755
        $region64: #{lossbalnet_clf_forward.1} parent=51 // pred_fallthru
          _
      $region52: #{lossbalnet_clf_forward.1} parent=5 // pred_fallthru
        _
      %p771 = scmp.le.s32.totalorder 2, %s17
      // Predicated region
      $region65: #{lossbalnet_clf_forward.1} parent=5 // pred_check
        %p772 = pneg %p771
      $region66: #{lossbalnet_clf_forward.1} parent=5 // pred_check_branch
        %774 = sbr.rel (%p772) target = $region68
      $region67: #{lossbalnet_clf_forward.1} parent=5 // pred_region
        %s775 = ssub.s32 %s17, 2
        // Predicated region
        $region69: #{lossbalnet_clf_forward.1} parent=67 // pred_check
          %p776 = pneg %p233
        $region70: #{lossbalnet_clf_forward.1} parent=67 // pred_check_branch
          %778 = sbr.rel (%p776) target = $region72
        $region71: #{lossbalnet_clf_forward.1} parent=67 // pred_region
          %s779 = sand.u32 %s218, 1
          %s780 = scalar_lea.sflag [#allocation4], %s779
          %s781 = sand.u32 %s218, 1
          %s782 = scalar_lea.vmem [#allocation3], %s781
          %784 = dma.done %s780, 16
        $region72: #{lossbalnet_clf_forward.1} parent=67 // pred_fallthru
          _
      $region68: #{lossbalnet_clf_forward.1} parent=5 // pred_fallthru
        _
    $region6: #{lossbalnet_clf_forward.1} parent=1 // loop_footer
      %s21 = sadd.s32 1, %s17
    $region7: #{lossbalnet_clf_forward.1} parent=1 // loop_footer_branch
      %16 = sbr.rel target = $region3
    $region8: #{lossbalnet_clf_forward.1} parent=1 // loop_exit
      _
    %785 = vsyncpa [#allocation4], 1
    %s786 = scalar_lea.sflag [#allocation4], 1
    %787 = vsyncpa %s786, 1

</llo_original>
